<compile_context>
chip_gen: v7x
topology: tpu7x:2x2x1
jax: 0.10.0
libtpu: 0.0.40
codegen_flags: <defaults>
</compile_context>

<pallas_src>
import jax
import jax.numpy as jnp
from jax.experimental import pallas as pl
from jax.experimental.pallas import tpu as pltpu

NUM_DIGITS = 16
NUM_HIDDEN_UNITS = 150
NUM_OUT = 4
DEFAULT_TILE_B = 4096  # amortizes per-step overhead; ~6 MiB VMEM per step


def _round_up(x, m):
    return ((x + m - 1) // m) * m


def mlp_kernel(x_ref, w1_ref, b1_ref, w2_ref, b2_ref, o_ref):
    # Hidden layer: (TB, 16) @ (16, 150) in f32, bias + relu fused.
    h = jnp.maximum(
        jnp.dot(x_ref[...], w1_ref[...], preferred_element_type=jnp.float32)
        + b1_ref[...],
        0.0,
    )
    # Output layer: (TB, 150) @ (150, 4) in f32, bias add; store narrow (TB, 4).
    o_ref[...] = (
        jnp.dot(h, w2_ref[...], preferred_element_type=jnp.float32)
        + b2_ref[...]
    ).astype(o_ref.dtype)


def network_forward(x, w1, b1, w2, b2, *, tile_b=DEFAULT_TILE_B):
    """x: (B, 16) f32; w1: (16,150); b1: (1,150); w2: (150,4); b2: (1,4).

    Weights are stored as (in_features, out_features), i.e. transposed vs.
    PyTorch's (out, in) layout, so the kernel computes y = x @ W + b.
    """
    B = x.shape[0]

    # Batch tile: single step for small B, 4096-row tiles for large B.
    # Grid uses cdiv so a ragged last block is handled by Pallas (no jnp.pad).
    tb = min(tile_b, _round_up(B, 8))
    grid = (pl.cdiv(B, tb),)

    flops = 2 * B * (NUM_DIGITS * NUM_HIDDEN_UNITS + NUM_HIDDEN_UNITS * NUM_OUT)
    bytes_accessed = (
        B * NUM_DIGITS * 4                      # x read
        + B * NUM_OUT * 4                       # narrow output write
        + NUM_DIGITS * NUM_HIDDEN_UNITS * 4     # w1 (read once, stays resident)
        + NUM_HIDDEN_UNITS * NUM_OUT * 4        # w2
        + (NUM_HIDDEN_UNITS + NUM_OUT) * 4      # biases
    )

    return pl.pallas_call(
        mlp_kernel,
        out_shape=jax.ShapeDtypeStruct((B, NUM_OUT), jnp.float32),
        grid_spec=pltpu.PrefetchScalarGridSpec(
            num_scalar_prefetch=0,
            grid=grid,
            in_specs=[
                # x: tiled over batch, pipelined.
                pl.BlockSpec((tb, NUM_DIGITS), lambda i: (i, 0)),
                # Weights / biases: constant block index -> resident in VMEM.
                pl.BlockSpec((NUM_DIGITS, NUM_HIDDEN_UNITS), lambda i: (0, 0)),
                pl.BlockSpec((1, NUM_HIDDEN_UNITS), lambda i: (0, 0)),
                pl.BlockSpec((NUM_HIDDEN_UNITS, NUM_OUT), lambda i: (0, 0)),
                pl.BlockSpec((1, NUM_OUT), lambda i: (0, 0)),
            ],
            out_specs=pl.BlockSpec((tb, NUM_OUT), lambda i: (i, 0)),
        ),
        compiler_params=pltpu.CompilerParams(
            dimension_semantics=("parallel",),  # megacore sharding on v7x
            vmem_limit_bytes=64 << 20,          # explicit headroom, portable to v7x
        ),
        cost_estimate=pl.CostEstimate(
            flops=flops, transcendentals=0, bytes_accessed=bytes_accessed
        ),
    )(x, w1, b1, w2, b2)


def init_params(key):
    """Deterministic init mimicking PyTorch nn.Linear default (uniform ±1/sqrt(fan_in))."""
    k1, k2, k3, k4 = jax.random.split(key, 4)
    bound1 = 1.0 / jnp.sqrt(NUM_DIGITS)
    bound2 = 1.0 / jnp.sqrt(NUM_HIDDEN_UNITS)
    # Stored as (in, out): transposed relative to PyTorch's (out, in) weight.
    w1 = jax.random.uniform(k1, (NUM_DIGITS, NUM_HIDDEN_UNITS), jnp.float32,
                            -bound1, bound1)
    b1 = jax.random.uniform(k2, (1, NUM_HIDDEN_UNITS), jnp.float32, -bound1, bound1)
    w2 = jax.random.uniform(k3, (NUM_HIDDEN_UNITS, NUM_OUT), jnp.float32,
                            -bound2, bound2)
    b2 = jax.random.uniform(k4, (1, NUM_OUT), jnp.float32, -bound2, bound2)
    return w1, b1, w2, b2


if __name__ == "__main__":
    key = jax.random.PRNGKey(0)
    kx, kp = jax.random.split(key)

    B = 8
    x = jax.random.normal(kx, (B, NUM_DIGITS), jnp.float32)
    w1, b1, w2, b2 = init_params(kp)

    out = network_forward(x, w1, b1, w2, b2)
    out = jax.block_until_ready(out)

    # Reference check in plain JAX (same math as the PyTorch forward, f32).
    ref = jnp.maximum(x @ w1 + b1, 0.0) @ w2 + b2
    assert out.shape == (B, NUM_OUT)
    assert jnp.allclose(out, ref, atol=2e-3, rtol=2e-3), (
        float(jnp.max(jnp.abs(out - ref))))

    print("KERNEL_OK")
</pallas_src>

<mosaic_0001>
module attributes {stable_mosaic.version = 11 : i64} {
  func.func @mlp_kernel(%arg0: i32, %arg1: memref<8x16xf32, #tpu.memory_space<vmem>>, %arg2: memref<16x150xf32, #tpu.memory_space<vmem>>, %arg3: memref<1x150xf32, #tpu.memory_space<vmem>>, %arg4: memref<150x4xf32, #tpu.memory_space<vmem>>, %arg5: memref<1x4xf32, #tpu.memory_space<vmem>>, %arg6: memref<8x4xf32, #tpu.memory_space<vmem>>) attributes {dimension_semantics = [#tpu.dimension_semantics<parallel>], iteration_bounds = array<i64: 1>, scalar_prefetch = 0 : i64, scratch_operands = 0 : i64, tpu.core_type = #tpu.core_type<tc>, window_params = [{transform_indices = @transform_0, window_bounds = array<i64: 8, 16>}, {pipeline_mode = #tpu.pipeline_mode<synchronous>, transform_indices = @transform_1, window_bounds = array<i64: 16, 150>}, {pipeline_mode = #tpu.pipeline_mode<synchronous>, transform_indices = @transform_2, window_bounds = array<i64: 1, 150>}, {pipeline_mode = #tpu.pipeline_mode<synchronous>, transform_indices = @transform_3, window_bounds = array<i64: 150, 4>}, {pipeline_mode = #tpu.pipeline_mode<synchronous>, transform_indices = @transform_4, window_bounds = array<i64: 1, 4>}, {transform_indices = @transform_5, window_bounds = array<i64: 8, 4>}]} {
    %c0 = arith.constant 0 : index
    %c0_0 = arith.constant 0 : index
    %0 = vector.load %arg1[%c0, %c0_0] : memref<8x16xf32, #tpu.memory_space<vmem>>, vector<8x16xf32>
    %c0_1 = arith.constant 0 : index
    %c0_2 = arith.constant 0 : index
    %1 = vector.load %arg2[%c0_1, %c0_2] : memref<16x150xf32, #tpu.memory_space<vmem>>, vector<16x150xf32>
    %cst = arith.constant dense<0.000000e+00> : vector<8x150xf32>
    %2 = tpu.matmul %0, %1, %cst {dimension_numbers = #tpu.dot_dimension_numbers<[1], [0], [0], [1], [0, 0, 1, 1], [], []>} : vector<8x16xf32>, vector<16x150xf32>, vector<8x150xf32> -> vector<8x150xf32>
    %c0_3 = arith.constant 0 : index
    %c0_4 = arith.constant 0 : index
    %3 = vector.load %arg3[%c0_3, %c0_4] : memref<1x150xf32, #tpu.memory_space<vmem>>, vector<1x150xf32>
    %4 = vector.broadcast %3 : vector<1x150xf32> to vector<8x150xf32>
    %5 = arith.addf %2, %4 : vector<8x150xf32>
    %cst_5 = arith.constant 0.000000e+00 : f32
    %6 = vector.broadcast %cst_5 : f32 to vector<8x150xf32>
    %7 = arith.maximumf %5, %6 : vector<8x150xf32>
    %c0_6 = arith.constant 0 : index
    %c0_7 = arith.constant 0 : index
    %8 = vector.load %arg4[%c0_6, %c0_7] : memref<150x4xf32, #tpu.memory_space<vmem>>, vector<150x4xf32>
    %cst_8 = arith.constant dense<0.000000e+00> : vector<8x4xf32>
    %9 = tpu.matmul %7, %8, %cst_8 {dimension_numbers = #tpu.dot_dimension_numbers<[1], [0], [0], [1], [0, 0, 1, 1], [], []>} : vector<8x150xf32>, vector<150x4xf32>, vector<8x4xf32> -> vector<8x4xf32>
    %c0_9 = arith.constant 0 : index
    %c0_10 = arith.constant 0 : index
    %10 = vector.load %arg5[%c0_9, %c0_10] : memref<1x4xf32, #tpu.memory_space<vmem>>, vector<1x4xf32>
    %11 = vector.broadcast %10 : vector<1x4xf32> to vector<8x4xf32>
    %12 = arith.addf %9, %11 : vector<8x4xf32>
    %c0_11 = arith.constant 0 : index
    %c0_12 = arith.constant 0 : index
    %13 = vector.load %arg6[%c0_11, %c0_12] : memref<8x4xf32, #tpu.memory_space<vmem>>, vector<8x4xf32>
    tpu.vector_store %arg6[%c0_11, %c0_12], %12 {strides = array<i32>} : memref<8x4xf32, #tpu.memory_space<vmem>>, vector<8x4xf32>,
    return
  }
  func.func @transform_0(%arg0: i32) -> (i32, i32) {
    %c0_i32 = arith.constant 0 : i32
    %c0_i32_0 = arith.constant 0 : i32
    return %arg0, %c0_i32 : i32, i32
  }
  func.func @transform_1(%arg0: i32) -> (i32, i32) {
    %c0_i32 = arith.constant 0 : i32
    %c0_i32_0 = arith.constant 0 : i32
    %c0_i32_1 = arith.constant 0 : i32
    return %c0_i32, %c0_i32_0 : i32, i32
  }
  func.func @transform_2(%arg0: i32) -> (i32, i32) {
    %c0_i32 = arith.constant 0 : i32
    %c0_i32_0 = arith.constant 0 : i32
    %c0_i32_1 = arith.constant 0 : i32
    return %c0_i32, %c0_i32_0 : i32, i32
  }
  func.func @transform_3(%arg0: i32) -> (i32, i32) {
    %c0_i32 = arith.constant 0 : i32
    %c0_i32_0 = arith.constant 0 : i32
    %c0_i32_1 = arith.constant 0 : i32
    return %c0_i32, %c0_i32_0 : i32, i32
  }
  func.func @transform_4(%arg0: i32) -> (i32, i32) {
    %c0_i32 = arith.constant 0 : i32
    %c0_i32_0 = arith.constant 0 : i32
    %c0_i32_1 = arith.constant 0 : i32
    return %c0_i32, %c0_i32_0 : i32, i32
  }
  func.func @transform_5(%arg0: i32) -> (i32, i32) {
    %c0_i32 = arith.constant 0 : i32
    %c0_i32_0 = arith.constant 0 : i32
    return %arg0, %c0_i32 : i32, i32
  }
}

</mosaic_0001>

<llo_original>
// kernel: tpu_custom_call.1
$region0: #{tpu_custom_call.1}
  #allocation0 [shape = 'u32[]', space=smem, size = 0x4, offset = 0x4, fixed_abs, tag = 'smem constant byte address 0x4 - core index']
  #allocation1 [shape = 'u32[144,128]{1,0:T(1,128)}', space=vmem, size = 0x12000, scoped, tag = 'internal scratch']
  %s0 = inlined_call_operand.hbm [shape: f32[8,16], index: 0, kind: input, shape index: {}]
  %s1 = inlined_call_operand.hbm [shape: f32[16,150], index: 1, kind: input, shape index: {}]
  %s2 = inlined_call_operand.hbm [shape: f32[1,150], index: 2, kind: input, shape index: {}]
  %s3 = inlined_call_operand.hbm [shape: f32[150,4], index: 3, kind: input, shape index: {}]
  %s4 = inlined_call_operand.hbm [shape: f32[1,4], index: 4, kind: input, shape index: {}]
  %s5 = inlined_call_operand.hbm [shape: f32[8,4], index: 5, kind: output, shape index: {}]
  %s6 = sld [smem:[#allocation0]]
  $region50: #{tpu_custom_call.1} parent=0
    _
  %s8 = ssub.s32 1, %s6
  %s9 = scalar_select 0, %s8, %s6
  $region1: #{tpu_custom_call.1} parent=0
    #allocation2 [shape = 'u8[4096]{0}', space=vmem, size = 0x1000, scoped, tag = 'input window, operand 0, single buffered']
    #allocation3 [shape = 's32[1]{0}', space=sflag, size = 0x4, scoped, tag = 'scoped memory for tpu_custom_call.1']
    #allocation4 [shape = 's32[1]{0}', space=sflag, size = 0x4, scoped, tag = 'scoped memory for tpu_custom_call.1']
    #allocation5 [shape = 'u8[16384]{0}', space=vmem, size = 0x4000, scoped, tag = 'input window, operand 1, single buffered']
    #allocation6 [shape = 's32[1]{0}', space=sflag, size = 0x4, scoped, tag = 'scoped memory for tpu_custom_call.1']
    #allocation7 [shape = 'u8[1024]{0}', space=vmem, size = 0x400, scoped, tag = 'input window, operand 2, single buffered']
    #allocation8 [shape = 'u8[77824]{0}', space=vmem, size = 0x13000, scoped, tag = 'input window, operand 3, single buffered']
    #allocation9 [shape = 's32[1]{0}', space=sflag, size = 0x4, scoped, tag = 'scoped memory for tpu_custom_call.1']
    #allocation10 [shape = 'u8[512]{0}', space=vmem, size = 0x400, scoped, tag = 'input window, operand 4, single buffered']
    #allocation11 [shape = 'u8[4096]{0}', space=vmem, size = 0x1000, scoped, tag = 'output window, operand 0, single buffered']
    %10 = vsyncpa [#allocation3], 0
    %11 = vsyncpa [#allocation6], 0
    %12 = vsyncpa [#allocation9], 0
    %13 = vsyncpa [#allocation4], 0
    // Predicated region
    $region2: #{tpu_custom_call.1} parent=1 // pred_check
      _
    $region3: #{tpu_custom_call.1} parent=1 // pred_check_branch
      %15 = sbr.rel (0) target = $region5
    $region4: #{tpu_custom_call.1} parent=1 // pred_region
      %s17 = ssub.s32 128, 128
      %18 = vsyncadd [#allocation3], %s17
      %s20 = sshll.u32 [#allocation2], 4
      %s21 = int_to_ptr.vmem [resolvable:$true] %s20
      %23 = dma.hbm_to_vmem [thread:$0]  %s0, 128, %s21, [#allocation3]
    $region5: #{tpu_custom_call.1} parent=1 // pred_fallthru
      _
    // Predicated region
    $region6: #{tpu_custom_call.1} parent=1 // pred_check
      _
    $region7: #{tpu_custom_call.1} parent=1 // pred_check_branch
      %25 = sbr.rel (0) target = $region9
    $region8: #{tpu_custom_call.1} parent=1 // pred_region
      %s27 = ssub.s32 512, 512
      %28 = vsyncadd [#allocation6], %s27
      %s29 = sshll.u32 [#allocation5], 4
      %s30 = int_to_ptr.vmem [resolvable:$true] %s29
      %35 = dma.hbm_to_vmem [thread:$0]  %s1, 512, %s30, [#allocation6], 256, 256, 16
    $region9: #{tpu_custom_call.1} parent=1 // pred_fallthru
      _
    // Predicated region
    $region10: #{tpu_custom_call.1} parent=1 // pred_check
      _
    $region11: #{tpu_custom_call.1} parent=1 // pred_check_branch
      %37 = sbr.rel (0) target = $region13
    $region12: #{tpu_custom_call.1} parent=1 // pred_region
      %s39 = ssub.s32 32, 32
      %40 = vsyncadd [#allocation6], %s39
      %s42 = sshll.u32 [#allocation7], 4
      %s43 = int_to_ptr.vmem [resolvable:$true] %s42
      %45 = dma.hbm_to_vmem [thread:$0]  %s2, 32, %s43, [#allocation6]
    $region13: #{tpu_custom_call.1} parent=1 // pred_fallthru
      _
    // Predicated region
    $region14: #{tpu_custom_call.1} parent=1 // pred_check
      _
    $region15: #{tpu_custom_call.1} parent=1 // pred_check_branch
      %47 = sbr.rel (0) target = $region17
    $region16: #{tpu_custom_call.1} parent=1 // pred_region
      %s49 = ssub.s32 2432, 2432
      %50 = vsyncadd [#allocation9], %s49
      %s51 = sshll.u32 [#allocation8], 4
      %s52 = int_to_ptr.vmem [resolvable:$true] %s51
      %57 = dma.hbm_to_vmem [thread:$0]  %s3, 2432, %s52, [#allocation9], 128, 128, 8
    $region17: #{tpu_custom_call.1} parent=1 // pred_fallthru
      _
    // Predicated region
    $region18: #{tpu_custom_call.1} parent=1 // pred_check
      _
    $region19: #{tpu_custom_call.1} parent=1 // pred_check_branch
      %59 = sbr.rel (0) target = $region21
    $region20: #{tpu_custom_call.1} parent=1 // pred_region
      %s61 = ssub.s32 16, 16
      %62 = vsyncadd [#allocation9], %s61
      %s64 = sshll.u32 [#allocation10], 4
      %s65 = int_to_ptr.vmem [resolvable:$true] %s64
      %67 = dma.hbm_to_vmem [thread:$0]  %s4, 16, %s65, [#allocation9]
    $region21: #{tpu_custom_call.1} parent=1 // pred_fallthru
      _
    // Predicated region
    $region22: #{tpu_custom_call.1} parent=1 // pred_check
      _
    $region23: #{tpu_custom_call.1} parent=1 // pred_check_branch
      %69 = sbr.rel (0) target = $region25
    $region24: #{tpu_custom_call.1} parent=1 // pred_region
      %70 = dma.done [#allocation3], 128
    $region25: #{tpu_custom_call.1} parent=1 // pred_fallthru
      _
    // Predicated region
    $region26: #{tpu_custom_call.1} parent=1 // pred_check
      _
    $region27: #{tpu_custom_call.1} parent=1 // pred_check_branch
      %72 = sbr.rel (0) target = $region29
    $region28: #{tpu_custom_call.1} parent=1 // pred_region
      %73 = dma.done [#allocation6], 512
    $region29: #{tpu_custom_call.1} parent=1 // pred_fallthru
      _
    // Predicated region
    $region30: #{tpu_custom_call.1} parent=1 // pred_check
      _
    $region31: #{tpu_custom_call.1} parent=1 // pred_check_branch
      %75 = sbr.rel (0) target = $region33
    $region32: #{tpu_custom_call.1} parent=1 // pred_region
      %76 = dma.done [#allocation6], 32
    $region33: #{tpu_custom_call.1} parent=1 // pred_fallthru
      _
    // Predicated region
    $region34: #{tpu_custom_call.1} parent=1 // pred_check
      _
    $region35: #{tpu_custom_call.1} parent=1 // pred_check_branch
      %78 = sbr.rel (0) target = $region37
    $region36: #{tpu_custom_call.1} parent=1 // pred_region
      %79 = dma.done [#allocation9], 2432
    $region37: #{tpu_custom_call.1} parent=1 // pred_fallthru
      _
    // Predicated region
    $region38: #{tpu_custom_call.1} parent=1 // pred_check
      _
    $region39: #{tpu_custom_call.1} parent=1 // pred_check_branch
      %81 = sbr.rel (0) target = $region41
    $region40: #{tpu_custom_call.1} parent=1 // pred_region
      %82 = dma.done [#allocation9], 16
    $region41: #{tpu_custom_call.1} parent=1 // pred_fallthru
      _
    %v83 = vld [vmem:[#allocation2] sm:$0xff]
    %v84 = vld [vmem:[#allocation5] sm:$0xff]
    %v85 = vld [vmem:[#allocation5 + $0x8] sm:$0xff]
    %v86 = vld [vmem:[#allocation5 + $0x10] sm:$0xff]
    %v87 = vld [vmem:[#allocation5 + $0x18] sm:$0xff]
    %v88 = vld [vmem:[#allocation7] sm:$0x3]
    %v90 = vlaneseq
    %v91 = vshrl.u32 %v90, 7
    %v92 = vsub.s32 0, %v91
    %v93 = vrot.slane %v88, %v92
    %v94 = vlaneseq
    %v95 = vshrl.u32 %v94, 7
    %v96 = vsub.s32 1, %v95
    %v97 = vrot.slane %v88, %v96
    %vm100 = vcmask 130048
    %v102 = vsel %vm100, %v83, 0
    %104 = vmatprep.subr.mxu0 %v85
    %105 = vmatpush1.msra.mxu0 %v84
    %106 = vmatprep.subr.mxu0 %v87
    %107 = vmatpush1.msra.mxu0 %v86
    %108 = vmatprep.subr.mxu0 0.0
    %109 = vmatpush1.msra.mxu0 0.0
    %110 = vmatprep.subr.mxu0 0.0
    %111 = vmatpush1.msra.mxu0 0.0
    %112 = vmatprep.subr.mxu0 0.0
    %113 = vmatpush1.msra.mxu0 0.0
    %114 = vmatprep.subr.mxu0 0.0
    %115 = vmatpush1.msra.mxu0 0.0
    %116 = vmatprep.subr.mxu0 0.0
    %117 = vmatpush1.msra.mxu0 0.0
    %118 = vmatprep.subr.mxu0 0.0
    %119 = vmatpush1.msra.mxu0 0.0
    %120 = vmatprep.subr.mxu0 0.0
    %121 = vmatpush1.msra.mxu0 0.0
    %122 = vmatprep.subr.mxu0 0.0
    %123 = vmatpush1.msra.mxu0 0.0
    %124 = vmatprep.subr.mxu0 0.0
    %125 = vmatpush1.msra.mxu0 0.0
    %126 = vmatprep.subr.mxu0 0.0
    %127 = vmatpush1.msra.mxu0 0.0
    %128 = vmatprep.subr.mxu0 0.0
    %129 = vmatpush1.msra.mxu0 0.0
    %130 = vmatprep.subr.mxu0 0.0
    %131 = vmatpush1.msra.mxu0 0.0
    %132 = vmatprep.subr.mxu0 0.0
    %133 = vmatpush1.msra.mxu0 0.0
    %134 = vmatprep.subr.mxu0 0.0
    %135 = vmatpush1.msra.mxu0 0.0
    %136 = vmatprep.subr.mxu0 0.0
    %137 = vmatpush1.msra.mxu0 0.0
    %138 = vmatprep.subr.mxu0 0.0
    %139 = vmatpush1.msra.mxu0 0.0
    %140 = vmatprep.subr.mxu0 0.0
    %141 = vmatpush1.msra.mxu0 0.0
    %142 = vmatprep.subr.mxu0 0.0
    %143 = vmatpush1.msra.mxu0 0.0
    %144 = vmatprep.subr.mxu0 0.0
    %145 = vmatpush1.msra.mxu0 0.0
    %146 = vmatprep.subr.mxu0 0.0
    %147 = vmatpush1.msra.mxu0 0.0
    %148 = vmatprep.subr.mxu0 0.0
    %149 = vmatpush1.msra.mxu0 0.0
    %150 = vmatprep.subr.mxu0 0.0
    %151 = vmatpush1.msra.mxu0 0.0
    %152 = vmatprep.subr.mxu0 0.0
    %153 = vmatpush1.msra.mxu0 0.0
    %154 = vmatprep.subr.mxu0 0.0
    %155 = vmatpush1.msra.mxu0 0.0
    %156 = vmatprep.subr.mxu0 0.0
    %157 = vmatpush1.msra.mxu0 0.0
    %158 = vmatprep.subr.mxu0 0.0
    %159 = vmatpush1.msra.mxu0 0.0
    %160 = vmatprep.subr.mxu0 0.0
    %161 = vmatpush1.msra.mxu0 0.0
    %162 = vmatprep.subr.mxu0 0.0
    %163 = vmatpush1.msra.mxu0 0.0
    %164 = vmatprep.subr.mxu0 0.0
    %165 = vmatpush1.msra.mxu0 0.0
    %166 = vmatprep.subr.mxu0 0.0
    %167 = vmatpush1.msra.mxu0 0.0
    %168 = vmatprep.mubr.f32.mxu0 0.0
    %169 = vmatmul.mubr.f32.gmra.mrb[0].mxu0 %v102
    %v170 = vpop.f32.mrb[0].mxu0
    %v171 = vadd.f32 %v93, %v170
    %v172 = vpop.f32.mrb[0].mxu0
    %v173 = vadd.f32 %v97, %v172
    %174 = vdwg.mxu0
    %v175 = vmax.f32 %v171, 0.0
    %v176 = vmax.f32 %v173, 0.0
    %v177 = vld [vmem:[#allocation8] sm:$0xff]
    %v178 = vld [vmem:[#allocation8 + $0x8] sm:$0xff]
    %v179 = vld [vmem:[#allocation8 + $0x10] sm:$0xff]
    %v180 = vld [vmem:[#allocation8 + $0x18] sm:$0xff]
    %v181 = vld [vmem:[#allocation8 + $0x20] sm:$0xff]
    %v182 = vld [vmem:[#allocation8 + $0x28] sm:$0xff]
    %v183 = vld [vmem:[#allocation8 + $0x30] sm:$0xff]
    %v184 = vld [vmem:[#allocation8 + $0x38] sm:$0xff]
    %v185 = vld [vmem:[#allocation8 + $0x40] sm:$0xff]
    %v186 = vld [vmem:[#allocation8 + $0x48] sm:$0xff]
    %v187 = vld [vmem:[#allocation8 + $0x50] sm:$0xff]
    %v188 = vld [vmem:[#allocation8 + $0x58] sm:$0xff]
    %v189 = vld [vmem:[#allocation8 + $0x60] sm:$0xff]
    %v190 = vld [vmem:[#allocation8 + $0x68] sm:$0xff]
    %v191 = vld [vmem:[#allocation8 + $0x70] sm:$0xff]
    %v192 = vld [vmem:[#allocation8 + $0x78] sm:$0xff]
    %v193 = vld [vmem:[#allocation8 + $0x80] sm:$0xff]
    %v194 = vld [vmem:[#allocation8 + $0x88] sm:$0xff]
    %v195 = vld [vmem:[#allocation8 + $0x90] sm:$0x3f]
    %v196 = vld [vmem:[#allocation10] sm:$0x1]
    %v198 = vlaneseq
    %v199 = vshrl.u32 %v198, 7
    %v200 = vsub.s32 0, %v199
    %v201 = vrot.slane %v196, %v200
    %vm203 = vcmask 179200
    %v205 = vsel %vm203, %v176, 0
    %vm207 = vcmask 1045504
    %v209 = vsel %vm207, %v195, 0
    %211 = vmatprep.subr.mxu0 0.0
    %212 = vmatpush1.msra.mxu0 %v177
    %213 = vmatprep.subr.mxu0 0.0
    %214 = vmatpush1.msra.mxu0 %v178
    %215 = vmatprep.subr.mxu0 0.0
    %216 = vmatpush1.msra.mxu0 %v179
    %217 = vmatprep.subr.mxu0 0.0
    %218 = vmatpush1.msra.mxu0 %v180
    %219 = vmatprep.subr.mxu0 0.0
    %220 = vmatpush1.msra.mxu0 %v181
    %221 = vmatprep.subr.mxu0 0.0
    %222 = vmatpush1.msra.mxu0 %v182
    %223 = vmatprep.subr.mxu0 0.0
    %224 = vmatpush1.msra.mxu0 %v183
    %225 = vmatprep.subr.mxu0 0.0
    %226 = vmatpush1.msra.mxu0 %v184
    %227 = vmatprep.subr.mxu0 0.0
    %228 = vmatpush1.msra.mxu0 %v185
    %229 = vmatprep.subr.mxu0 0.0
    %230 = vmatpush1.msra.mxu0 %v186
    %231 = vmatprep.subr.mxu0 0.0
    %232 = vmatpush1.msra.mxu0 %v187
    %233 = vmatprep.subr.mxu0 0.0
    %234 = vmatpush1.msra.mxu0 %v188
    %235 = vmatprep.subr.mxu0 0.0
    %236 = vmatpush1.msra.mxu0 %v189
    %237 = vmatprep.subr.mxu0 0.0
    %238 = vmatpush1.msra.mxu0 %v190
    %239 = vmatprep.subr.mxu0 0.0
    %240 = vmatpush1.msra.mxu0 %v191
    %241 = vmatprep.subr.mxu0 0.0
    %242 = vmatpush1.msra.mxu0 %v192
    %243 = vmatprep.subr.mxu0 0.0
    %244 = vmatpush1.msra.mxu0 %v193
    %245 = vmatprep.subr.mxu0 0.0
    %246 = vmatpush1.msra.mxu0 %v194
    %247 = vmatprep.subr.mxu0 0.0
    %248 = vmatpush1.msra.mxu0 %v209
    %249 = vmatprep.subr.mxu0 0.0
    %250 = vmatpush1.msra.mxu0 0.0
    %251 = vmatprep.subr.mxu0 0.0
    %252 = vmatpush1.msra.mxu0 0.0
    %253 = vmatprep.subr.mxu0 0.0
    %254 = vmatpush1.msra.mxu0 0.0
    %255 = vmatprep.subr.mxu0 0.0
    %256 = vmatpush1.msra.mxu0 0.0
    %257 = vmatprep.subr.mxu0 0.0
    %258 = vmatpush1.msra.mxu0 0.0
    %259 = vmatprep.subr.mxu0 0.0
    %260 = vmatpush1.msra.mxu0 0.0
    %261 = vmatprep.subr.mxu0 0.0
    %262 = vmatpush1.msra.mxu0 0.0
    %263 = vmatprep.subr.mxu0 0.0
    %264 = vmatpush1.msra.mxu0 0.0
    %265 = vmatprep.subr.mxu0 0.0
    %266 = vmatpush1.msra.mxu0 0.0
    %267 = vmatprep.subr.mxu0 0.0
    %268 = vmatpush1.msra.mxu0 0.0
    %269 = vmatprep.subr.mxu0 0.0
    %270 = vmatpush1.msra.mxu0 0.0
    %271 = vmatprep.subr.mxu0 0.0
    %272 = vmatpush1.msra.mxu0 0.0
    %273 = vmatprep.subr.mxu0 0.0
    %274 = vmatpush1.msra.mxu0 0.0
    %275 = vmatprep.mubr.f32.mxu0 %v205
    %276 = vmatmul.mubr.f32.gmra.mrb[0].mxu0 %v175
    %v277 = vpop.f32.mrb[0].mxu0
    %v278 = vadd.f32 %v201, %v277
    %v279 = vpop.f32.mrb[0].mxu0
    %280 = vdwg.mxu0
    %vm281 = vcmask 31744
    %282 = vst.msk [vmem:[#allocation11] sm:$0xff] %vm281, %v278
    // Predicated region
    $region42: #{tpu_custom_call.1} parent=1 // pred_check
      _
    $region43: #{tpu_custom_call.1} parent=1 // pred_check_branch
      %284 = sbr.rel (0) target = $region45
    $region44: #{tpu_custom_call.1} parent=1 // pred_region
      %s286 = ssub.s32 128, 128
      %287 = vsyncadd [#allocation4], %s286
      %s289 = sshll.u32 [#allocation11], 4
      %s290 = int_to_ptr.vmem [resolvable:$true] %s289
      %292 = dma.vmem_to_hbm [thread:$0]  %s290, 128, %s5, [#allocation4]
    $region45: #{tpu_custom_call.1} parent=1 // pred_fallthru
      _
    // Predicated region
    $region46: #{tpu_custom_call.1} parent=1 // pred_check
      _
    $region47: #{tpu_custom_call.1} parent=1 // pred_check_branch
      %294 = sbr.rel (0) target = $region49
    $region48: #{tpu_custom_call.1} parent=1 // pred_region
      %295 = dma.done [#allocation4], 128
    $region49: #{tpu_custom_call.1} parent=1 // pred_fallthru
      _
    %296 = vsyncpa [#allocation3], 1
    %297 = vsyncpa [#allocation6], 1
    %298 = vsyncpa [#allocation9], 1
    %299 = vsyncpa [#allocation4], 1

</llo_original>
